<compile_context>
chip_gen: v7x
topology: tpu7x:2x2x1
jax: 0.10.0
libtpu: 0.0.40
codegen_flags: <defaults>
</compile_context>

<pallas_src>
import functools

import jax
import jax.numpy as jnp
from jax.experimental import pallas as pl
from jax.experimental.pallas import tpu as pltpu


def _round_up(v, m):
    return (v + m - 1) // m * m


# ----------------------------- Pallas kernels ------------------------------ #

def _conv_stats_kernel(*refs, apply_pre, n_valid_last, needs_mask):
    """Per row tile: (optional fused BN+LReLU of the previous layer) => matmul.

    refs layout:
      apply_pre=False: (m, w, b, y, stats)
      apply_pre=True : (m, w, b, scale7, shift7, y, stats)
    m:     (TR, Kp)   gathered neighborhood rows (compute dtype)
    w:     (Kp, Cp)   conv weight, transposed + zero padded (compute dtype)
    b:     (1, Cp)    bias (f32)
    scale7/shift7: (1, Kp) previous-layer BN affine tiled 7x over column groups
    y:     (TR, Cp)   raw conv output (store dtype)
    stats: (2, Cp)    row 0 = partial sum, row 1 = partial sum of squares (f32)
    """
    if apply_pre:
        m_ref, w_ref, b_ref, sc_ref, sh_ref, y_ref, stats_ref = refs
    else:
        m_ref, w_ref, b_ref, y_ref, stats_ref = refs

    m = m_ref[...]
    if apply_pre:
        # Previous layer's BatchNorm + LeakyReLU, fused in front of this conv.
        # Pure FMA + select on the VPU, runs under MXU slack.
        z = m.astype(jnp.float32) * sc_ref[...] + sh_ref[...]
        z = jnp.where(z > 0, z, 0.2 * z)
        m = z.astype(m_ref.dtype)

    y = jnp.dot(m, w_ref[...], preferred_element_type=jnp.float32) + b_ref[...]
    y_ref[...] = y.astype(y_ref.dtype)

    def _write_stats(yv):
        stats_ref[0:1, :] = jnp.sum(yv, axis=0, keepdims=True)
        stats_ref[1:2, :] = jnp.sum(yv * yv, axis=0, keepdims=True)

    if not needs_mask:
        _write_stats(y)
    else:
        last = pl.num_programs(0) - 1

        @pl.when(pl.program_id(0) != last)
        def _():
            _write_stats(y)

        @pl.when(pl.program_id(0) == last)
        def _():
            # Only the last tile contains padding rows; mask them out of BN.
            row = jax.lax.broadcasted_iota(jnp.int32, y.shape, 0)
            _write_stats(jnp.where(row < n_valid_last, y, 0.0))


def _bn_lrelu_kernel(y_ref, scale_ref, shift_ref, o_ref):
    # y: (TR2, Cp) store dtype; scale/shift: (1, Cp) f32.
    z = y_ref[...].astype(jnp.float32) * scale_ref[...] + shift_ref[...]
    o_ref[...] = jnp.where(z > 0, z, 0.2 * z)


# ------------------------------ tiling helpers ------------------------------ #

def _compiler_params(tile_bytes):
    # BlockSpec double-buffers each operand: 2x tile bytes + fixed headroom,
    # clamped to v7x's 64 MiB/TC VMEM.
    need = 2 * tile_bytes + (8 << 20)
    return pltpu.CompilerParams(
        dimension_semantics=("parallel",),
        vmem_limit_bytes=int(min(max(need, 16 << 20), 64 << 20)))


def _pad_channels(c):
    if c < 64:
        return c                       # tiny channel counts: no 16x lane-pad traffic
    if c < 128:
        return 128
    return _round_up(c, 256)           # full 256-wide MXU result tiles (v6e/v7x)


def _pad_contract(k):
    return _round_up(k, 16) if k < 128 else _round_up(k, 128)


def _pick_row_tiles(r, tile_rows):
    tr = min(tile_rows, _round_up(r, 16))
    if tr >= r and r > 16:
        # Guarantee >= 2 row tiles so the "parallel" grid axis can shard
        # across TensorCores on multi-TC chips (v7x megacore).
        tr = _round_up((r + 1) // 2, 16)
    rp = _round_up(r, tr)
    return tr, rp, rp // tr


# ----------------------- conv (+ optional fused BN) pass --------------------- #

def _conv_stats(m, w, bias, *, pre_scale=None, pre_shift=None,
                tile_rows=512, compute_dtype=jnp.bfloat16):
    """Tiled conv (m @ w.T + bias) + exact BN batch statistics under tiling.

    m: (R, K) gathered neighborhood rows, already in compute/store dtype.
    w: (out_ch, K); bias: (out_ch,).
    pre_scale/pre_shift: optional per-channel BN affine of the PREVIOUS layer;
      applied (tiled 7x across neighbor column groups) + LeakyReLU to m
      in-kernel right before the matmul.

    Returns (y_padded (Rp, Cp) store dtype, mu (out_ch,), var (out_ch,), (tr, nt)).
    Padding rows/cols never contribute to stats; padded rows are never indexed
    by downstream gathers.
    """
    r, k = m.shape
    c = w.shape[0]
    kp = _pad_contract(k)
    cp = _pad_channels(c)
    tr, rp, nt = _pick_row_tiles(r, tile_rows)

    is_bf16 = jnp.dtype(compute_dtype) == jnp.dtype(jnp.bfloat16)
    store_dtype = jnp.bfloat16 if is_bf16 else jnp.float32

    m_p = jnp.pad(m, ((0, rp - r), (0, kp - k)))
    w_p = jnp.pad(w.T.astype(compute_dtype), ((0, kp - k), (0, cp - c)))
    b_p = jnp.pad(bias.astype(jnp.float32), (0, cp - c))[None, :]

    inputs = [m_p, w_p, b_p]
    in_specs = [
        pl.BlockSpec((tr, kp), lambda i: (i, 0)),
        pl.BlockSpec((kp, cp), lambda i: (0, 0)),
        pl.BlockSpec((1, cp), lambda i: (0, 0)),
    ]

    apply_pre = pre_scale is not None
    if apply_pre:
        rep = k // pre_scale.shape[0]                       # = 7 neighbor slots
        sc7 = jnp.pad(jnp.tile(pre_scale.astype(jnp.float32), rep), (0, kp - k))
        sh7 = jnp.pad(jnp.tile(pre_shift.astype(jnp.float32), rep), (0, kp - k))
        inputs += [sc7[None, :], sh7[None, :]]
        in_specs += [pl.BlockSpec((1, kp), lambda i: (0, 0)),
                     pl.BlockSpec((1, kp), lambda i: (0, 0))]

    msize = jnp.dtype(m_p.dtype).itemsize
    wsize = jnp.dtype(compute_dtype).itemsize
    ssize = jnp.dtype(store_dtype).itemsize
    tile_bytes = (tr * kp * msize + kp * cp * wsize + cp * 4
                  + tr * cp * ssize + 2 * cp * 4
                  + (2 * kp * 4 if apply_pre else 0))

    kern = functools.partial(
        _conv_stats_kernel, apply_pre=apply_pre,
        n_valid_last=r - tr * (nt - 1), needs_mask=(rp != r))

    y_p, stats = pl.pallas_call(
        kern,
        out_shape=(
            jax.ShapeDtypeStruct((rp, cp), store_dtype),
            jax.ShapeDtypeStruct((nt, 2, cp), jnp.float32),
        ),
        grid_spec=pltpu.PrefetchScalarGridSpec(
            num_scalar_prefetch=0,
            grid=(nt,),
            in_specs=in_specs,
            out_specs=[
                pl.BlockSpec((tr, cp), lambda i: (i, 0)),
                pl.BlockSpec((None, 2, cp), lambda i: (i, 0, 0)),
            ],
        ),
        compiler_params=_compiler_params(tile_bytes),
    )(*inputs)

    ssum = jnp.sum(stats[:, 0, :c], axis=0)
    ssq = jnp.sum(stats[:, 1, :c], axis=0)
    mu = ssum / r
    # TODO(synk): E[x^2]-E[x]^2 can cancel when |mean| >> std; switch to
    # shifted per-tile sums if tighter agreement with torch BN is needed.
    var = jnp.maximum(ssq / r - mu * mu, 0.0)               # biased var (PyTorch BN)
    return y_p, mu, var, (tr, nt)


def _bn_affine(mu, var, gamma, beta):
    scale = gamma.astype(jnp.float32) * jax.lax.rsqrt(var + 1e-5)
    shift = beta.astype(jnp.float32) - mu * scale
    return scale, shift


def _bn_lrelu(y_p, scale, shift, *, tr, nt):
    """Final streaming normalize + LeakyReLU pass (last layer only)."""
    rp, cp = y_p.shape
    c = scale.shape[0]
    # Pure streaming pass: use a larger row tile (amortize per-step overhead).
    f = 1
    for cand in range(nt, 0, -1):
        if nt % cand == 0 and tr * cand <= 2048:
            f = cand
            break
    tr2, nt2 = tr * f, nt // f

    scale_p = jnp.pad(scale.astype(jnp.float32), (0, cp - c))[None, :]
    shift_p = jnp.pad(shift.astype(jnp.float32), (0, cp - c))[None, :]
    ssize = jnp.dtype(y_p.dtype).itemsize
    tile_bytes = tr2 * cp * (ssize + 4) + 2 * cp * 4

    return pl.pallas_call(
        _bn_lrelu_kernel,
        out_shape=jax.ShapeDtypeStruct((rp, cp), jnp.float32),
        grid_spec=pltpu.PrefetchScalarGridSpec(
            num_scalar_prefetch=0,
            grid=(nt2,),
            in_specs=[
                pl.BlockSpec((tr2, cp), lambda i: (i, 0)),
                pl.BlockSpec((1, cp), lambda i: (0, 0)),
                pl.BlockSpec((1, cp), lambda i: (0, 0)),
            ],
            out_specs=pl.BlockSpec((tr2, cp), lambda i: (i, 0)),
        ),
        compiler_params=_compiler_params(tile_bytes),
    )(y_p, scale_p, shift_p)


# ------------------------------ JAX glue ----------------------------------- #

def pool_mean_flat(x, pool_neigh_orders):
    """pool_layer (mean) with exact quirky-reshape semantics.

    x: (N_in, F, B)  ->  ((N*B, F) flat layout with rows in (node, batch)
    order, N), where N = (N_in + 6) // 4.
    """
    n_in, f, b = x.shape
    n = (n_in + 6) // 4
    g = x[pool_neigh_orders[: n * 7]].reshape(n, f, 7, b)   # raw reshape, as torch
    m = jnp.mean(g, axis=2)                                 # (N, F, B)
    return jnp.transpose(m, (0, 2, 1)).reshape(n * b, f), n


def _gather_rows(x_flat, neigh_orders, n_nodes, batch):
    """1-ring gather on flat (>=N*B, C) activations -> (N*B, 7*C)."""
    c = x_flat.shape[1]
    idx = neigh_orders[: n_nodes * 7].reshape(n_nodes, 1, 7)
    flat_idx = idx * batch + jnp.arange(batch, dtype=idx.dtype).reshape(1, batch, 1)
    rows = x_flat[flat_idx.reshape(-1)]                     # (N*B*7, C)
    return rows.reshape(n_nodes * batch, 7 * c)


def down_block_forward(x, params, neigh_orders, pool_neigh_orders, *,
                       tile_rows=512, compute_dtype=jnp.bfloat16):
    """first=False branch: mean pool => (conv => BN => LeakyReLU) * 2.

    x: (N_in, in_ch, B)  ->  (N, out_ch, B)
    """
    b = x.shape[2]
    out_ch = params["w1"].shape[0]
    xp_flat, n = pool_mean_flat(x, pool_neigh_orders)       # (N*B, in_ch) f32
    r = n * b

    # Cast once BEFORE the 7x gather so the gathered matrix is half-width (bf16).
    m1 = _gather_rows(xp_flat.astype(compute_dtype), neigh_orders, n, b)
    y1_p, mu1, var1, _ = _conv_stats(m1, params["w1"], params["b1"],
                                     tile_rows=tile_rows,
                                     compute_dtype=compute_dtype)
    scale1, shift1 = _bn_affine(mu1, var1, params["gamma1"], params["beta1"])

    # Gather the RAW conv-1 output (row padding is never indexed); its BN +
    # LeakyReLU is fused into the conv-2 kernel, so layer 1 needs no pass 2.
    y1_src = y1_p if y1_p.shape[1] == out_ch else y1_p[:, :out_ch]
    m2 = _gather_rows(y1_src, neigh_orders, n, b)           # (N*B, 7*out_ch)
    y2_p, mu2, var2, tiling2 = _conv_stats(
        m2, params["w2"], params["b2"], pre_scale=scale1, pre_shift=shift1,
        tile_rows=tile_rows, compute_dtype=compute_dtype)
    scale2, shift2 = _bn_affine(mu2, var2, params["gamma2"], params["beta2"])

    z2_p = _bn_lrelu(y2_p, scale2, shift2, tr=tiling2[0], nt=tiling2[1])
    z2 = z2_p[:r, :out_ch]
    return jnp.transpose(z2.reshape(n, b, out_ch), (0, 2, 1))  # (N, out_ch, B)


# --------------------------- pure-JAX reference ----------------------------- #

def _reference(x, params, neigh_orders, pool_neigh_orders):
    """Literal translation of the PyTorch forward (pool + 2x conv/BN/LReLU)."""
    n_in, f, b = x.shape
    n = (n_in + 6) // 4

    g = x[pool_neigh_orders[: n * 7]].reshape(n, f, 7, -1)
    g = jnp.swapaxes(g, 3, 2)
    g = jnp.swapaxes(g, 2, 1)
    g = jnp.swapaxes(g, 1, 0)
    m = jnp.mean(g, axis=3)
    m = jnp.swapaxes(m, 1, 0)
    m = jnp.swapaxes(m, 1, 2)                               # (N, F, B)

    def conv_bn_lrelu(xin, w, bias, gamma, beta):
        nb = xin[neigh_orders[: n * 7]].reshape(n, 7, xin.shape[1], b)
        mat = jnp.transpose(nb, (0, 3, 1, 2)).reshape(n * b, -1)
        y = mat @ w.T + bias
        mu = jnp.mean(y, axis=0, keepdims=True)
        var = jnp.mean((y - mu) ** 2, axis=0, keepdims=True)
        z = (y - mu) / jnp.sqrt(var + 1e-5) * gamma + beta
        z = jnp.where(z > 0, z, 0.2 * z)
        return jnp.transpose(z.reshape(n, b, -1), (0, 2, 1))

    y1 = conv_bn_lrelu(m, params["w1"], params["b1"],
                       params["gamma1"], params["beta1"])
    y2 = conv_bn_lrelu(y1, params["w2"], params["b2"],
                       params["gamma2"], params["beta2"])
    return y2


# --------------------------------- main ------------------------------------ #

if __name__ == "__main__":
    key = jax.random.PRNGKey(0)
    N_in, in_ch, out_ch, B = 162, 4, 8, 2      # icosphere level: 162 -> 42 nodes
    N = (N_in + 6) // 4                        # 42

    keys = jax.random.split(key, 7)
    x = jax.random.normal(keys[0], (N_in, in_ch, B), dtype=jnp.float32)
    # synthetic neighbor tables (deterministic); real ones come from the icosphere
    pool_neigh_orders = jax.random.randint(keys[1], (N * 7,), 0, N_in)
    neigh_orders = jax.random.randint(keys[2], (N * 7,), 0, N)

    params = {
        # onering conv = Linear(7*in, out): weight (out, 7*in), bias (out,)
        "w1": jax.random.normal(keys[3], (out_ch, 7 * in_ch), jnp.float32) * 0.1,
        "b1": jax.random.normal(keys[4], (out_ch,), jnp.float32) * 0.1,
        "w2": jax.random.normal(keys[5], (out_ch, 7 * out_ch), jnp.float32) * 0.1,
        "b2": jax.random.normal(keys[6], (out_ch,), jnp.float32) * 0.1,
        # BatchNorm1d default affine init: weight=1, bias=0
        "gamma1": jnp.ones((out_ch,), jnp.float32),
        "beta1": jnp.zeros((out_ch,), jnp.float32),
        "gamma2": jnp.ones((out_ch,), jnp.float32),
        "beta2": jnp.zeros((out_ch,), jnp.float32),
    }

    ref = jax.block_until_ready(
        _reference(x, params, neigh_orders, pool_neigh_orders))

    # f32 MXU path: tight match against the literal reference.
    out_f32 = down_block_forward(x, params, neigh_orders, pool_neigh_orders,
                                 compute_dtype=jnp.float32)
    out_f32 = jax.block_until_ready(out_f32)
    assert out_f32.shape == (N, out_ch, B), out_f32.shape
    err = float(jnp.max(jnp.abs(out_f32 - ref)))
    assert jnp.allclose(out_f32, ref, atol=1e-4, rtol=1e-4), err

    # default bf16 MXU path (perf default): looser check, BN keeps it bounded.
    out_bf16 = down_block_forward(x, params, neigh_orders, pool_neigh_orders)
    out_bf16 = jax.block_until_ready(out_bf16)
    assert out_bf16.shape == (N, out_ch, B), out_bf16.shape
    assert bool(jnp.all(jnp.isfinite(out_bf16)))
    assert float(jnp.max(jnp.abs(out_bf16 - ref))) < 0.15

    print("KERNEL_OK")
</pallas_src>

<mosaic_0001>
module attributes {stable_mosaic.version = 11 : i64} {
  func.func @_conv_stats_kernel(%arg0: i32, %arg1: memref<48x32xf32, #tpu.memory_space<vmem>>, %arg2: memref<32x8xf32, #tpu.memory_space<vmem>>, %arg3: memref<1x8xf32, #tpu.memory_space<vmem>>, %arg4: memref<48x8xf32, #tpu.memory_space<vmem>>, %arg5: memref<1x2x8xf32, #tpu.memory_space<vmem>>) attributes {dimension_semantics = [#tpu.dimension_semantics<parallel>], iteration_bounds = array<i64: 2>, scalar_prefetch = 0 : i64, scratch_operands = 0 : i64, tpu.core_type = #tpu.core_type<tc>, window_params = [{transform_indices = @transform_0, window_bounds = array<i64: 48, 32>}, {pipeline_mode = #tpu.pipeline_mode<synchronous>, transform_indices = @transform_1, window_bounds = array<i64: 32, 8>}, {pipeline_mode = #tpu.pipeline_mode<synchronous>, transform_indices = @transform_2, window_bounds = array<i64: 1, 8>}, {transform_indices = @transform_3, window_bounds = array<i64: 48, 8>}, {transform_indices = @transform_4, window_bounds = array<i64: 1, 2, 8>}]} {
    %c0 = arith.constant 0 : index
    %c0_0 = arith.constant 0 : index
    %0 = vector.load %arg1[%c0, %c0_0] : memref<48x32xf32, #tpu.memory_space<vmem>>, vector<48x32xf32>
    %c0_1 = arith.constant 0 : index
    %c0_2 = arith.constant 0 : index
    %1 = vector.load %arg2[%c0_1, %c0_2] : memref<32x8xf32, #tpu.memory_space<vmem>>, vector<32x8xf32>
    %cst = arith.constant dense<0.000000e+00> : vector<48x8xf32>
    %2 = tpu.matmul %0, %1, %cst {dimension_numbers = #tpu.dot_dimension_numbers<[1], [0], [0], [1], [0, 0, 1, 1], [], []>} : vector<48x32xf32>, vector<32x8xf32>, vector<48x8xf32> -> vector<48x8xf32>
    %c0_3 = arith.constant 0 : index
    %c0_4 = arith.constant 0 : index
    %3 = vector.load %arg3[%c0_3, %c0_4] : memref<1x8xf32, #tpu.memory_space<vmem>>, vector<1x8xf32>
    %4 = vector.broadcast %3 : vector<1x8xf32> to vector<48x8xf32>
    %5 = arith.addf %2, %4 : vector<48x8xf32>
    %c0_5 = arith.constant 0 : index
    %c0_6 = arith.constant 0 : index
    %6 = vector.load %arg4[%c0_5, %c0_6] : memref<48x8xf32, #tpu.memory_space<vmem>>, vector<48x8xf32>
    tpu.vector_store %arg4[%c0_5, %c0_6], %5 {strides = array<i32>} : memref<48x8xf32, #tpu.memory_space<vmem>>, vector<48x8xf32>,
    %c1_i32 = arith.constant 1 : i32
    %7 = arith.cmpi ne, %arg0, %c1_i32 : i32
    %8 = arith.extui %7 : i1 to i32
    %c0_i32 = arith.constant 0 : i32
    %9 = arith.cmpi ne, %8, %c0_i32 : i32
    scf.if %9 {
      %cst_9 = arith.constant dense<0.000000e+00> : vector<8xf32>
      %13 = vector.multi_reduction <add>, %5, %cst_9 [0] : vector<48x8xf32> to vector<8xf32>
      %14 = vector.shape_cast %13 : vector<8xf32> to vector<1x8xf32>
      %c0_10 = arith.constant 0 : index
      %c0_11 = arith.constant 0 : index
      %c0_12 = arith.constant 0 : index
      %15 = vector.load %arg5[%c0_10, %c0_11, %c0_12] : memref<1x2x8xf32, #tpu.memory_space<vmem>>, vector<1x1x8xf32>
      %16 = vector.shape_cast %15 : vector<1x1x8xf32> to vector<1x8xf32>
      %17 = vector.shape_cast %14 : vector<1x8xf32> to vector<1x1x8xf32>
      tpu.vector_store %arg5[%c0_10, %c0_11, %c0_12], %17 {strides = array<i32>} : memref<1x2x8xf32, #tpu.memory_space<vmem>>, vector<1x1x8xf32>,
      %18 = arith.mulf %5, %5 : vector<48x8xf32>
      %cst_13 = arith.constant dense<0.000000e+00> : vector<8xf32>
      %19 = vector.multi_reduction <add>, %18, %cst_13 [0] : vector<48x8xf32> to vector<8xf32>
      %20 = vector.shape_cast %19 : vector<8xf32> to vector<1x8xf32>
      %c0_14 = arith.constant 0 : index
      %c1 = arith.constant 1 : index
      %c0_15 = arith.constant 0 : index
      %21 = vector.load %arg5[%c0_14, %c1, %c0_15] : memref<1x2x8xf32, #tpu.memory_space<vmem>>, vector<1x1x8xf32>
      %22 = vector.shape_cast %21 : vector<1x1x8xf32> to vector<1x8xf32>
      %23 = vector.shape_cast %20 : vector<1x8xf32> to vector<1x1x8xf32>
      tpu.vector_store %arg5[%c0_14, %c1, %c0_15], %23 {strides = array<i32>} : memref<1x2x8xf32, #tpu.memory_space<vmem>>, vector<1x1x8xf32>,
    } else {
    }
    %c1_i32_7 = arith.constant 1 : i32
    %10 = arith.cmpi eq, %arg0, %c1_i32_7 : i32
    %11 = arith.extui %10 : i1 to i32
    %c0_i32_8 = arith.constant 0 : i32
    %12 = arith.cmpi ne, %11, %c0_i32_8 : i32
    scf.if %12 {
      %13 = tpu.iota {dimensions = array<i32: 0>} : vector<48x8xi32>
      %c36_i32 = arith.constant 36 : i32
      %14 = vector.broadcast %c36_i32 : i32 to vector<48x8xi32>
      %15 = arith.cmpi slt, %13, %14 : vector<48x8xi32>
      %cst_9 = arith.constant 0.000000e+00 : f32
      %16 = vector.broadcast %cst_9 : f32 to vector<48x8xf32>
      %17 = arith.select %15, %5, %16 : vector<48x8xi1>, vector<48x8xf32>
      %cst_10 = arith.constant dense<0.000000e+00> : vector<8xf32>
      %18 = vector.multi_reduction <add>, %17, %cst_10 [0] : vector<48x8xf32> to vector<8xf32>
      %19 = vector.shape_cast %18 : vector<8xf32> to vector<1x8xf32>
      %c0_11 = arith.constant 0 : index
      %c0_12 = arith.constant 0 : index
      %c0_13 = arith.constant 0 : index
      %20 = vector.load %arg5[%c0_11, %c0_12, %c0_13] : memref<1x2x8xf32, #tpu.memory_space<vmem>>, vector<1x1x8xf32>
      %21 = vector.shape_cast %20 : vector<1x1x8xf32> to vector<1x8xf32>
      %22 = vector.shape_cast %19 : vector<1x8xf32> to vector<1x1x8xf32>
      tpu.vector_store %arg5[%c0_11, %c0_12, %c0_13], %22 {strides = array<i32>} : memref<1x2x8xf32, #tpu.memory_space<vmem>>, vector<1x1x8xf32>,
      %23 = arith.mulf %17, %17 : vector<48x8xf32>
      %cst_14 = arith.constant dense<0.000000e+00> : vector<8xf32>
      %24 = vector.multi_reduction <add>, %23, %cst_14 [0] : vector<48x8xf32> to vector<8xf32>
      %25 = vector.shape_cast %24 : vector<8xf32> to vector<1x8xf32>
      %c0_15 = arith.constant 0 : index
      %c1 = arith.constant 1 : index
      %c0_16 = arith.constant 0 : index
      %26 = vector.load %arg5[%c0_15, %c1, %c0_16] : memref<1x2x8xf32, #tpu.memory_space<vmem>>, vector<1x1x8xf32>
      %27 = vector.shape_cast %26 : vector<1x1x8xf32> to vector<1x8xf32>
      %28 = vector.shape_cast %25 : vector<1x8xf32> to vector<1x1x8xf32>
      tpu.vector_store %arg5[%c0_15, %c1, %c0_16], %28 {strides = array<i32>} : memref<1x2x8xf32, #tpu.memory_space<vmem>>, vector<1x1x8xf32>,
    } else {
    }
    return
  }
  func.func @transform_0(%arg0: i32) -> (i32, i32) {
    %c0_i32 = arith.constant 0 : i32
    %c0_i32_0 = arith.constant 0 : i32
    return %arg0, %c0_i32 : i32, i32
  }
  func.func @transform_1(%arg0: i32) -> (i32, i32) {
    %c0_i32 = arith.constant 0 : i32
    %c0_i32_0 = arith.constant 0 : i32
    %c0_i32_1 = arith.constant 0 : i32
    return %c0_i32, %c0_i32_0 : i32, i32
  }
  func.func @transform_2(%arg0: i32) -> (i32, i32) {
    %c0_i32 = arith.constant 0 : i32
    %c0_i32_0 = arith.constant 0 : i32
    %c0_i32_1 = arith.constant 0 : i32
    return %c0_i32, %c0_i32_0 : i32, i32
  }
  func.func @transform_3(%arg0: i32) -> (i32, i32) {
    %c0_i32 = arith.constant 0 : i32
    %c0_i32_0 = arith.constant 0 : i32
    return %arg0, %c0_i32 : i32, i32
  }
  func.func @transform_4(%arg0: i32) -> (i32, i32, i32) {
    %c0_i32 = arith.constant 0 : i32
    %c0_i32_0 = arith.constant 0 : i32
    %c0_i32_1 = arith.constant 0 : i32
    return %arg0, %c0_i32, %c0_i32_0 : i32, i32, i32
  }
}

</mosaic_0001>

<llo_original>
// kernel: tpu_custom_call.1
$region0: #{tpu_custom_call.1}
  #allocation0 [shape = 'u32[]', space=smem, size = 0x4, offset = 0x4, fixed_abs, tag = 'smem constant byte address 0x4 - core index']
  #allocation1 [shape = 'u32[144,128]{1,0:T(1,128)}', space=vmem, size = 0x12000, scoped, tag = 'internal scratch']
  %s0 = inlined_call_operand.vmem [shape: f32[96,32], index: 0, kind: input, shape index: {}]
  %s1 = inlined_call_operand.vmem [shape: f32[32,8], index: 1, kind: input, shape index: {}]
  %s2 = inlined_call_operand.vmem [shape: f32[1,8], index: 2, kind: input, shape index: {}]
  %s3 = inlined_call_operand.vmem [shape: f32[96,8], index: 3, kind: output, shape index: {0}]
  %s4 = inlined_call_operand.hbm [shape: f32[2,2,8], index: 4, kind: output, shape index: {1}]
  %5 = xla_tuple %s3, %s4
  %s6 = sld [smem:[#allocation0]]
  $region61: #{tpu_custom_call.1} parent=0
    _
  %s8 = ssub.s32 1, %s6
  %s9 = scalar_select 0, %s8, %s6
  $region1: #{tpu_custom_call.1} parent=0
    #allocation2 [shape = 'u8[2048]{0}', space=vmem, size = 0x800, scoped, tag = 'output window, operand 1']
    #allocation3 [shape = 's32[2]{0}', space=sflag, size = 0x8, scoped, tag = 'scoped memory for tpu_custom_call.1']
    %10 = vsyncpa [#allocation3], 0
    %s11 = scalar_lea.sflag [#allocation3], 1
    %12 = vsyncpa %s11, 0
    loop: start=0, step=1, limit=4
    $region2: #{tpu_custom_call.1} parent=1 // loop_pre_header
      _
    $region3: #{tpu_custom_call.1} parent=1 // loop_header
      %s14 = sphi 0, %s18
      %p15 = scmp.ge.s32.totalorder %s14, 4
      %s24 = sphi 0, %s26
      %s27 = sphi 0, %s24
      %s28 = sphi 0, %s27
      %s44 = sphi 0, %s28
      %s48 = sphi 0, %s48
      %s50 = sphi 0, %s48
      %s51 = sphi 0, %s50
      %s65 = sphi 0, %s51
      %s69 = sphi 0, %s69
      %s71 = sphi 0, %s69
      %s72 = sphi 0, %s71
      %s86 = sphi 0, %s72
      %s92 = sphi 0, %s94
      %s95 = sphi 0, %s92
      %s96 = sphi 0, %s95
      %s112 = sphi 0, %s96
      %s118 = sphi 0, %s120
      %s121 = sphi 0, %s118
      %s122 = sphi 0, %s121
      %s138 = sphi 0, %s122
    $region4: #{tpu_custom_call.1} parent=1 // loop_header_branch
      %17 = sbr.rel (%p15) target = $region8
    $region5: #{tpu_custom_call.1} parent=1 // loop_body
      %s19 = ssub.s32 %s14, 1
      %s20 = ssub.s32 %s14, 2
      %s21 = sadd.s32 %s14, 1
      %s22 = ssub.s32 %s14, %s21
      %p23 = scmp.eq.s32.totalorder %s22, 0
      %s25 = sadd.s32 %s24, 1
      %s26 = scalar_select %p23, %s24, %s25
      %p29 = pneg %p23
      %p30 = scmp.eq.s32.totalorder %s14, 1
      %p31 = por %p29, %p30
      %p32 = scmp.ne.s32.totalorder %s24, %s27
      %p33 = scmp.eq.s32.totalorder %s14, 0
      %p34 = por %p32, %p33
      %p35 = scmp.ne.s32.totalorder %s24, %s27
      %p36 = scmp.eq.s32.totalorder %s19, 1
      %p37 = por %p35, %p36
      %p38 = scmp.ne.s32.totalorder %s27, %s28
      %p39 = scmp.eq.s32.totalorder %s19, 0
      %p40 = por %p38, %p39
      %p41 = scmp.ne.s32.totalorder %s27, %s28
      %p42 = scmp.eq.s32.totalorder %s20, 1
      %p43 = por %p41, %p42
      %p45 = scmp.ne.s32.totalorder %s28, %s44
      %p46 = scmp.eq.s32.totalorder %s20, 0
      %p47 = por %p45, %p46
      %s49 = sadd.s32 %s48, 1
      %p52 = scmp.eq.s32.totalorder %s14, 1
      %p53 = scmp.ne.s32.totalorder %s48, %s50
      %p54 = scmp.eq.s32.totalorder %s14, 0
      %p55 = por %p53, %p54
      %p56 = scmp.ne.s32.totalorder %s48, %s50
      %p57 = scmp.eq.s32.totalorder %s19, 1
      %p58 = por %p56, %p57
      %p59 = scmp.ne.s32.totalorder %s50, %s51
      %p60 = scmp.eq.s32.totalorder %s19, 0
      %p61 = por %p59, %p60
      %p62 = scmp.ne.s32.totalorder %s50, %s51
      %p63 = scmp.eq.s32.totalorder %s20, 1
      %p64 = por %p62, %p63
      %p66 = scmp.ne.s32.totalorder %s51, %s65
      %p67 = scmp.eq.s32.totalorder %s20, 0
      %p68 = por %p66, %p67
      %s70 = sadd.s32 %s69, 1
      %p73 = scmp.eq.s32.totalorder %s14, 1
      %p74 = scmp.ne.s32.totalorder %s69, %s71
      %p75 = scmp.eq.s32.totalorder %s14, 0
      %p76 = por %p74, %p75
      %p77 = scmp.ne.s32.totalorder %s69, %s71
      %p78 = scmp.eq.s32.totalorder %s19, 1
      %p79 = por %p77, %p78
      %p80 = scmp.ne.s32.totalorder %s71, %s72
      %p81 = scmp.eq.s32.totalorder %s19, 0
      %p82 = por %p80, %p81
      %p83 = scmp.ne.s32.totalorder %s71, %s72
      %p84 = scmp.eq.s32.totalorder %s20, 1
      %p85 = por %p83, %p84
      %p87 = scmp.ne.s32.totalorder %s72, %s86
      %p88 = scmp.eq.s32.totalorder %s20, 0
      %p89 = por %p87, %p88
      %s90 = ssub.s32 %s14, %s21
      %p91 = scmp.eq.s32.totalorder %s90, 0
      %s93 = sadd.s32 %s92, 1
      %s94 = scalar_select %p91, %s92, %s93
      %p97 = pneg %p91
      %p98 = scmp.eq.s32.totalorder %s14, 1
      %p99 = por %p97, %p98
      %p100 = scmp.ne.s32.totalorder %s92, %s95
      %p101 = scmp.eq.s32.totalorder %s14, 0
      %p102 = por %p100, %p101
      %p103 = scmp.ne.s32.totalorder %s92, %s95
      %p104 = scmp.eq.s32.totalorder %s19, 1
      %p105 = por %p103, %p104
      %p106 = scmp.ne.s32.totalorder %s95, %s96
      %p107 = scmp.eq.s32.totalorder %s19, 0
      %p108 = por %p106, %p107
      %p109 = scmp.ne.s32.totalorder %s95, %s96
      %p110 = scmp.eq.s32.totalorder %s20, 1
      %p111 = por %p109, %p110
      %p113 = scmp.ne.s32.totalorder %s96, %s112
      %p114 = scmp.eq.s32.totalorder %s20, 0
      %p115 = por %p113, %p114
      %s116 = ssub.s32 %s14, %s21
      %p117 = scmp.eq.s32.totalorder %s116, 0
      %s119 = sadd.s32 %s118, 1
      %s120 = scalar_select %p117, %s118, %s119
      %p123 = pneg %p117
      %p124 = scmp.eq.s32.totalorder %s14, 1
      %p125 = por %p123, %p124
      %p126 = scmp.ne.s32.totalorder %s118, %s121
      %p127 = scmp.eq.s32.totalorder %s14, 0
      %p128 = por %p126, %p127
      %p129 = scmp.ne.s32.totalorder %s118, %s121
      %p130 = scmp.eq.s32.totalorder %s19, 1
      %p131 = por %p129, %p130
      %p132 = scmp.ne.s32.totalorder %s121, %s122
      %p133 = scmp.eq.s32.totalorder %s19, 0
      %p134 = por %p132, %p133
      %p135 = scmp.ne.s32.totalorder %s121, %s122
      %p136 = scmp.eq.s32.totalorder %s20, 1
      %p137 = por %p135, %p136
      %p139 = scmp.ne.s32.totalorder %s122, %s138
      %p140 = scmp.eq.s32.totalorder %s20, 0
      %p141 = por %p139, %p140
      %p142 = scmp.le.s32.totalorder 1, %s14
      %p143 = scmp.lt.s32.totalorder %s14, 3
      %p144 = pnand %p142, %p143
      %p145 = pneg %p144
      // Predicated region
      $region9: #{tpu_custom_call.1} parent=5 // pred_check
        _
      $region10: #{tpu_custom_call.1} parent=5 // pred_check_branch
        %147 = sbr.rel (%p144) target = $region12
      $region11: #{tpu_custom_call.1} parent=5 // pred_region
        %s148 = ssub.s32 %s14, 1
        // Predicated region
        $region13: #{tpu_custom_call.1} parent=11 // pred_check
          %p149 = pneg %p61
        $region14: #{tpu_custom_call.1} parent=11 // pred_check_branch
          %151 = sbr.rel (%p149) target = $region16
        $region15: #{tpu_custom_call.1} parent=11 // pred_region
          _
        $region16: #{tpu_custom_call.1} parent=11 // pred_fallthru
          _
        // Predicated region
        $region17: #{tpu_custom_call.1} parent=11 // pred_check
          %p152 = pneg %p82
        $region18: #{tpu_custom_call.1} parent=11 // pred_check_branch
          %154 = sbr.rel (%p152) target = $region20
        $region19: #{tpu_custom_call.1} parent=11 // pred_region
          _
        $region20: #{tpu_custom_call.1} parent=11 // pred_fallthru
          _
      $region12: #{tpu_custom_call.1} parent=5 // pred_fallthru
        _
      %p155 = scmp.lt.s32.totalorder %s14, 2
      // Predicated region
      $region21: #{tpu_custom_call.1} parent=5 // pred_check
        %p156 = pneg %p155
      $region22: #{tpu_custom_call.1} parent=5 // pred_check_branch
        %158 = sbr.rel (%p156) target = $region24
      $region23: #{tpu_custom_call.1} parent=5 // pred_region
        // Predicated region
        $region25: #{tpu_custom_call.1} parent=23 // pred_check
          %p159 = pneg %p34
        $region26: #{tpu_custom_call.1} parent=23 // pred_check_branch
          %161 = sbr.rel (%p159) target = $region28
        $region27: #{tpu_custom_call.1} parent=23 // pred_region
          %s162 = smul.u32 6, %s14
          %p163 = scmp.lt.s32.totalorder %s162, 11
          %s164 = scalar_select %p163, %s162, 11
          %s165 = smul.addr %s164, 8
          %s166 = scalar_lea.vmem %s0, %s165
          %s167 = smul.u32 6, %s14
        $region28: #{tpu_custom_call.1} parent=23 // pred_fallthru
          _
      $region24: #{tpu_custom_call.1} parent=5 // pred_fallthru
        _
      %p168 = scmp.le.s32.totalorder 1, %s14
      %p169 = scmp.lt.s32.totalorder %s14, 3
      %p170 = pnand %p168, %p169
      %p171 = pneg %p170
      // Predicated region
      $region29: #{tpu_custom_call.1} parent=5 // pred_check
        _
      $region30: #{tpu_custom_call.1} parent=5 // pred_check_branch
        %173 = sbr.rel (%p170) target = $region32
      $region31: #{tpu_custom_call.1} parent=5 // pred_region
        %s174 = ssub.s32 %s14, 1
        %s175 = smul.u32 6, %s19
        %p176 = scmp.lt.s32.totalorder %s175, 11
        %s177 = scalar_select %p176, %s175, 11
        %s178 = smul.addr %s177, 8
        %s179 = scalar_lea.vmem %s0, %s178
        %p180 = pneg %p40
        %p181 = pneg %p37
        %p182 = pneg %p61
        %p183 = pneg %p58
        %p184 = pneg %p82
        %p185 = pneg %p79
        %p186 = pneg %p108
        %p187 = pneg %p105
        %s188 = smul.u32 6, %s19
        %p189 = scmp.lt.s32.totalorder %s188, 11
        %s190 = scalar_select %p189, %s188, 11
        %s191 = smul.addr %s190, 8
        %s192 = scalar_lea.vmem %s3, %s191
        %p193 = pneg %p134
        %p194 = pneg %p131
        %s195 = sand.u32 %s121, 1
        %s196 = scalar_lea.sflag [#allocation3], %s195
        %s197 = sand.u32 %s121, 1
        %s198 = smul.addr %s197, 2
        %s199 = scalar_lea.vmem [#allocation2], %s198
        %s200 = smul.u32 6, %s19
        %p201 = scmp.lt.s32.totalorder %s200, 11
        %s202 = scalar_select %p201, %s200, 11
        %s203 = smul.addr %s202, 8
        %s204 = scalar_lea.vmem %s0, %s203
        %s205 = smul.u32 6, %s19
        %s206 = smul.u32 6, %s19
        %p207 = scmp.lt.s32.totalorder %s206, 11
        %s208 = scalar_select %p207, %s206, 11
        %s209 = smul.addr %s208, 8
        %s210 = scalar_lea.vmem %s3, %s209
        %s211 = smul.u32 6, %s19
        %v212 = vld [vmem:[%s204] sm:$0xff]
        %v213 = vld [vmem:[%s204 + $0x8] sm:$0xff]
        %v214 = vld [vmem:[%s204 + $0x10] sm:$0xff]
        %v215 = vld [vmem:[%s204 + $0x18] sm:$0xff]
        %v216 = vld [vmem:[%s204 + $0x20] sm:$0xff]
        %v217 = vld [vmem:[%s204 + $0x28] sm:$0xff]
        %v218 = vld [vmem:[%s1] sm:$0xff]
        %v219 = vld [vmem:[%s1 + $0x8] sm:$0xff]
        %v220 = vld [vmem:[%s1 + $0x10] sm:$0xff]
        %v221 = vld [vmem:[%s1 + $0x18] sm:$0xff]
        %v222 = vld [vmem:[%s2] sm:$0x1]
        %v224 = vlaneseq
        %v225 = vshrl.u32 %v224, 7
        %v226 = vsub.s32 0, %v225
        %v227 = vrot.slane %v222, %v226
        %vm229 = vcmask 261120
        %v231 = vsel %vm229, %v212, 0
        %v234 = vsel %vm229, %v213, 0
        %v237 = vsel %vm229, %v214, 0
        %v240 = vsel %vm229, %v215, 0
        %v243 = vsel %vm229, %v216, 0
        %v246 = vsel %vm229, %v217, 0
        %248 = vmatprep.subr.mxu0 0.0
        %249 = vmatpush1.msra.mxu0 %v218
        %250 = vmatprep.subr.mxu0 0.0
        %251 = vmatpush1.msra.mxu0 %v219
        %252 = vmatprep.subr.mxu0 0.0
        %253 = vmatpush1.msra.mxu0 %v220
        %254 = vmatprep.subr.mxu0 0.0
        %255 = vmatpush1.msra.mxu0 %v221
        %256 = vmatprep.subr.mxu0 0.0
        %257 = vmatpush1.msra.mxu0 0.0
        %258 = vmatprep.subr.mxu0 0.0
        %259 = vmatpush1.msra.mxu0 0.0
        %260 = vmatprep.subr.mxu0 0.0
        %261 = vmatpush1.msra.mxu0 0.0
        %262 = vmatprep.subr.mxu0 0.0
        %263 = vmatpush1.msra.mxu0 0.0
        %264 = vmatprep.subr.mxu0 0.0
        %265 = vmatpush1.msra.mxu0 0.0
        %266 = vmatprep.subr.mxu0 0.0
        %267 = vmatpush1.msra.mxu0 0.0
        %268 = vmatprep.subr.mxu0 0.0
        %269 = vmatpush1.msra.mxu0 0.0
        %270 = vmatprep.subr.mxu0 0.0
        %271 = vmatpush1.msra.mxu0 0.0
        %272 = vmatprep.subr.mxu0 0.0
        %273 = vmatpush1.msra.mxu0 0.0
        %274 = vmatprep.subr.mxu0 0.0
        %275 = vmatpush1.msra.mxu0 0.0
        %276 = vmatprep.subr.mxu0 0.0
        %277 = vmatpush1.msra.mxu0 0.0
        %278 = vmatprep.subr.mxu0 0.0
        %279 = vmatpush1.msra.mxu0 0.0
        %280 = vmatprep.subr.mxu0 0.0
        %281 = vmatpush1.msra.mxu0 0.0
        %282 = vmatprep.subr.mxu0 0.0
        %283 = vmatpush1.msra.mxu0 0.0
        %284 = vmatprep.subr.mxu0 0.0
        %285 = vmatpush1.msra.mxu0 0.0
        %286 = vmatprep.subr.mxu0 0.0
        %287 = vmatpush1.msra.mxu0 0.0
        %288 = vmatprep.subr.mxu0 0.0
        %289 = vmatpush1.msra.mxu0 0.0
        %290 = vmatprep.subr.mxu0 0.0
        %291 = vmatpush1.msra.mxu0 0.0
        %292 = vmatprep.subr.mxu0 0.0
        %293 = vmatpush1.msra.mxu0 0.0
        %294 = vmatprep.subr.mxu0 0.0
        %295 = vmatpush1.msra.mxu0 0.0
        %296 = vmatprep.subr.mxu0 0.0
        %297 = vmatpush1.msra.mxu0 0.0
        %298 = vmatprep.subr.mxu0 0.0
        %299 = vmatpush1.msra.mxu0 0.0
        %300 = vmatprep.subr.mxu0 0.0
        %301 = vmatpush1.msra.mxu0 0.0
        %302 = vmatprep.subr.mxu0 0.0
        %303 = vmatpush1.msra.mxu0 0.0
        %304 = vmatprep.subr.mxu0 0.0
        %305 = vmatpush1.msra.mxu0 0.0
        %306 = vmatprep.subr.mxu0 0.0
        %307 = vmatpush1.msra.mxu0 0.0
        %308 = vmatprep.subr.mxu0 0.0
        %309 = vmatpush1.msra.mxu0 0.0
        %310 = vmatprep.subr.mxu0 0.0
        %311 = vmatpush1.msra.mxu0 0.0
        %312 = vmatprep.mubr.f32.mxu0 0.0
        %313 = vmatmul.mubr.f32.gmra.mrb[0].mxu0 %v231
        %v314 = vpop.f32.mrb[0].mxu0
        %v315 = vadd.f32 %v227, %v314
        %v316 = vpop.f32.mrb[0].mxu0
        %317 = vmatprep.mubr.f32.mxu0 0.0
        %318 = vmatmul.mubr.f32.gmra.mrb[0].mxu0 %v234
        %v319 = vpop.f32.mrb[0].mxu0
        %v320 = vadd.f32 %v227, %v319
        %v321 = vpop.f32.mrb[0].mxu0
        %322 = vmatprep.mubr.f32.mxu0 0.0
        %323 = vmatmul.mubr.f32.gmra.mrb[0].mxu0 %v237
        %v324 = vpop.f32.mrb[0].mxu0
        %v325 = vadd.f32 %v227, %v324
        %v326 = vpop.f32.mrb[0].mxu0
        %327 = vmatprep.mubr.f32.mxu0 0.0
        %328 = vmatmul.mubr.f32.gmra.mrb[0].mxu0 %v240
        %v329 = vpop.f32.mrb[0].mxu0
        %v330 = vadd.f32 %v227, %v329
        %v331 = vpop.f32.mrb[0].mxu0
        %332 = vmatprep.mubr.f32.mxu0 0.0
        %333 = vmatmul.mubr.f32.gmra.mrb[0].mxu0 %v243
        %v334 = vpop.f32.mrb[0].mxu0
        %v335 = vadd.f32 %v227, %v334
        %v336 = vpop.f32.mrb[0].mxu0
        %337 = vmatprep.mubr.f32.mxu0 0.0
        %338 = vmatmul.mubr.f32.gmra.mrb[0].mxu0 %v246
        %v339 = vpop.f32.mrb[0].mxu0
        %v340 = vadd.f32 %v227, %v339
        %v341 = vpop.f32.mrb[0].mxu0
        %342 = vdwg.mxu0
        %vm343 = vcmask 64512
        %344 = vst.msk [vmem:[%s210] sm:$0xff] %vm343, %v315
        %345 = vst.msk [vmem:[%s210 + $0x8] sm:$0xff] %vm343, %v320
        %346 = vst.msk [vmem:[%s210 + $0x10] sm:$0xff] %vm343, %v325
        %347 = vst.msk [vmem:[%s210 + $0x18] sm:$0xff] %vm343, %v330
        %348 = vst.msk [vmem:[%s210 + $0x20] sm:$0xff] %vm343, %v335
        %349 = vst.msk [vmem:[%s210 + $0x28] sm:$0xff] %vm343, %v340
        %p350 = scmp.ne.s32.totalorder %s19, 1
        // Predicated region
        $region33: #{tpu_custom_call.1} parent=31 // pred_check
          %p351 = pneg %p350
        $region34: #{tpu_custom_call.1} parent=31 // pred_check_branch
          %353 = sbr.rel (%p351) target = $region36
        $region35: #{tpu_custom_call.1} parent=31 // pred_region
          %v354 = vsel %vm343, %v315, 0.0
          %v355 = vsel %vm343, %v320, 0.0
          %v356 = vadd.f32 %v354, %v355
          %v357 = vsel %vm343, %v325, 0.0
          %v358 = vadd.f32 %v356, %v357
          %v359 = vsel %vm343, %v330, 0.0
          %v360 = vadd.f32 %v358, %v359
          %v361 = vsel %vm343, %v335, 0.0
          %v362 = vadd.f32 %v360, %v361
          %v363 = vsel %vm343, %v340, 0.0
          %v364 = vadd.f32 %v362, %v363
          %v365 = vrot.slane %v364, 4
          %v366 = vadd.f32 %v364, %v365
          %v367 = vrot.slane %v366, 2
          %v368 = vadd.f32 %v366, %v367
          %v369 = vrot.slane %v368, 1
          %v370 = vadd.f32 %v368, %v369
          %vm371 = vcmask 57344
          %372 = vst.msk [vmem:[%s199] sm:$0x1] %vm371, %v370
          %v373 = vmul.f32 %v315, %v315
          %v374 = vmul.f32 %v320, %v320
          %v375 = vmul.f32 %v325, %v325
          %v376 = vmul.f32 %v330, %v330
          %v377 = vmul.f32 %v335, %v335
          %v378 = vmul.f32 %v340, %v340
          %v379 = vsel %vm343, %v373, 0.0
          %v380 = vsel %vm343, %v374, 0.0
          %v381 = vadd.f32 %v379, %v380
          %v382 = vsel %vm343, %v375, 0.0
          %v383 = vadd.f32 %v381, %v382
          %v384 = vsel %vm343, %v376, 0.0
          %v385 = vadd.f32 %v383, %v384
          %v386 = vsel %vm343, %v377, 0.0
          %v387 = vadd.f32 %v385, %v386
          %v388 = vsel %vm343, %v378, 0.0
          %v389 = vadd.f32 %v387, %v388
          %v390 = vrot.slane %v389, 4
          %v391 = vadd.f32 %v389, %v390
          %v392 = vrot.slane %v391, 2
          %v393 = vadd.f32 %v391, %v392
          %v394 = vrot.slane %v393, 1
          %v395 = vadd.f32 %v393, %v394
          %396 = vst.msk [vmem:[%s199 + $0x1] sm:$0x1] %vm371, %v395
        $region36: #{tpu_custom_call.1} parent=31 // pred_fallthru
          _
        %p397 = scmp.eq.s32.totalorder %s19, 1
        // Predicated region
        $region37: #{tpu_custom_call.1} parent=31 // pred_check
          %p398 = pneg %p397
        $region38: #{tpu_custom_call.1} parent=31 // pred_check_branch
          %400 = sbr.rel (%p398) target = $region40
        $region39: #{tpu_custom_call.1} parent=31 // pred_region
          %v401 = vlaneseq
          %v402 = vshrl.u32 %v401, 7
          %v403 = vadd.s32 %v402, 8
          %v404 = vadd.s32 %v402, 16
          %v405 = vadd.s32 %v402, 24
          %v406 = vadd.s32 %v402, 32
          %v407 = vadd.s32 %v402, 40
          %vm408 = vcmp.lt.s32.totalorder %v402, 36
          %vm409 = vcmp.lt.s32.totalorder %v403, 36
          %vm410 = vcmp.lt.s32.totalorder %v404, 36
          %vm411 = vcmp.lt.s32.totalorder %v405, 36
          %vm412 = vcmp.lt.s32.totalorder %v406, 36
          %vm413 = vcmp.lt.s32.totalorder %v407, 36
          %v414 = vsel %vm408, %v315, 0.0
          %v415 = vsel %vm409, %v320, 0.0
          %v416 = vsel %vm410, %v325, 0.0
          %v417 = vsel %vm411, %v330, 0.0
          %v418 = vsel %vm412, %v335, 0.0
          %v419 = vsel %vm413, %v340, 0.0
          %v420 = vsel %vm343, %v414, 0.0
          %v421 = vsel %vm343, %v415, 0.0
          %v422 = vadd.f32 %v420, %v421
          %v423 = vsel %vm343, %v416, 0.0
          %v424 = vadd.f32 %v422, %v423
          %v425 = vsel %vm343, %v417, 0.0
          %v426 = vadd.f32 %v424, %v425
          %v427 = vsel %vm343, %v418, 0.0
          %v428 = vadd.f32 %v426, %v427
          %v429 = vsel %vm343, %v419, 0.0
          %v430 = vadd.f32 %v428, %v429
          %v431 = vrot.slane %v430, 4
          %v432 = vadd.f32 %v430, %v431
          %v433 = vrot.slane %v432, 2
          %v434 = vadd.f32 %v432, %v433
          %v435 = vrot.slane %v434, 1
          %v436 = vadd.f32 %v434, %v435
          %vm437 = vcmask 57344
          %438 = vst.msk [vmem:[%s199] sm:$0x1] %vm437, %v436
          %v439 = vmul.f32 %v414, %v414
          %v440 = vmul.f32 %v415, %v415
          %v441 = vmul.f32 %v416, %v416
          %v442 = vmul.f32 %v417, %v417
          %v443 = vmul.f32 %v418, %v418
          %v444 = vmul.f32 %v419, %v419
          %v445 = vsel %vm343, %v439, 0.0
          %v446 = vsel %vm343, %v440, 0.0
          %v447 = vadd.f32 %v445, %v446
          %v448 = vsel %vm343, %v441, 0.0
          %v449 = vadd.f32 %v447, %v448
          %v450 = vsel %vm343, %v442, 0.0
          %v451 = vadd.f32 %v449, %v450
          %v452 = vsel %vm343, %v443, 0.0
          %v453 = vadd.f32 %v451, %v452
          %v454 = vsel %vm343, %v444, 0.0
          %v455 = vadd.f32 %v453, %v454
          %v456 = vrot.slane %v455, 4
          %v457 = vadd.f32 %v455, %v456
          %v458 = vrot.slane %v457, 2
          %v459 = vadd.f32 %v457, %v458
          %v460 = vrot.slane %v459, 1
          %v461 = vadd.f32 %v459, %v460
          %462 = vst.msk [vmem:[%s199 + $0x1] sm:$0x1] %vm437, %v461
        $region40: #{tpu_custom_call.1} parent=31 // pred_fallthru
          _
        %s463 = smul.u32 6, %s19
        %p464 = scmp.lt.s32.totalorder %s463, 11
        %s465 = scalar_select %p464, %s463, 11
        %s466 = smul.addr %s465, 8
        %s467 = scalar_lea.vmem %s3, %s466
        %s468 = sand.u32 %s121, 1
        %s469 = scalar_lea.sflag [#allocation3], %s468
        %s470 = sand.u32 %s121, 1
        %s471 = smul.addr %s470, 2
        %s472 = scalar_lea.vmem [#allocation2], %s471
        // Predicated region
        $region41: #{tpu_custom_call.1} parent=31 // pred_check
          %p473 = pneg %p105
        $region42: #{tpu_custom_call.1} parent=31 // pred_check_branch
          %475 = sbr.rel (%p473) target = $region44
        $region43: #{tpu_custom_call.1} parent=31 // pred_region
          %s476 = smul.u32 6, %s19
        $region44: #{tpu_custom_call.1} parent=31 // pred_fallthru
          _
        // Predicated region
        $region45: #{tpu_custom_call.1} parent=31 // pred_check
          %p477 = pneg %p131
        $region46: #{tpu_custom_call.1} parent=31 // pred_check_branch
          %479 = sbr.rel (%p477) target = $region48
        $region47: #{tpu_custom_call.1} parent=31 // pred_region
          %s481 = ssub.s32 32, 32
          %482 = vsyncadd %s469, %s481
          %s483 = smul.addr %s19, 32
          %s484 = scalar_lea.hbm %s4, %s483
          %s486 = sshll.u32 %s472, 4
          %s487 = int_to_ptr.vmem [resolvable:$true] %s486
          %489 = dma.vmem_to_hbm [thread:$0]  %s487, 32, %s484, %s469
        $region48: #{tpu_custom_call.1} parent=31 // pred_fallthru
          _
      $region32: #{tpu_custom_call.1} parent=5 // pred_fallthru
        _
      %p490 = scmp.le.s32.totalorder 2, %s14
      // Predicated region
      $region49: #{tpu_custom_call.1} parent=5 // pred_check
        %p491 = pneg %p490
      $region50: #{tpu_custom_call.1} parent=5 // pred_check_branch
        %493 = sbr.rel (%p491) target = $region52
      $region51: #{tpu_custom_call.1} parent=5 // pred_region
        %s494 = ssub.s32 %s14, 2
        // Predicated region
        $region53: #{tpu_custom_call.1} parent=51 // pred_check
          %p495 = pneg %p111
        $region54: #{tpu_custom_call.1} parent=51 // pred_check_branch
          %497 = sbr.rel (%p495) target = $region56
        $region55: #{tpu_custom_call.1} parent=51 // pred_region
          %s498 = smul.u32 6, %s20
          %p499 = scmp.lt.s32.totalorder %s498, 11
          %s500 = scalar_select %p499, %s498, 11
          %s501 = smul.addr %s500, 8
          %s502 = scalar_lea.vmem %s3, %s501
        $region56: #{tpu_custom_call.1} parent=51 // pred_fallthru
          _
        // Predicated region
        $region57: #{tpu_custom_call.1} parent=51 // pred_check
          %p503 = pneg %p137
        $region58: #{tpu_custom_call.1} parent=51 // pred_check_branch
          %505 = sbr.rel (%p503) target = $region60
        $region59: #{tpu_custom_call.1} parent=51 // pred_region
          %s506 = sand.u32 %s122, 1
          %s507 = scalar_lea.sflag [#allocation3], %s506
          %s508 = sand.u32 %s122, 1
          %s509 = smul.addr %s508, 2
          %s510 = scalar_lea.vmem [#allocation2], %s509
          %511 = dma.done %s507, 32
        $region60: #{tpu_custom_call.1} parent=51 // pred_fallthru
          _
      $region52: #{tpu_custom_call.1} parent=5 // pred_fallthru
        _
    $region6: #{tpu_custom_call.1} parent=1 // loop_footer
      %s18 = sadd.s32 1, %s14
    $region7: #{tpu_custom_call.1} parent=1 // loop_footer_branch
      %13 = sbr.rel target = $region3
    $region8: #{tpu_custom_call.1} parent=1 // loop_exit
      _
    %512 = vsyncpa [#allocation3], 1
    %s513 = scalar_lea.sflag [#allocation3], 1
    %514 = vsyncpa %s513, 1

</llo_original>
